<compile_context>
chip_gen: v5e
topology: v5e:2x2
jax: 0.10.0
libtpu: 0.0.40
codegen_flags: <defaults>
</compile_context>

<pallas_src>
import functools

import jax
import jax.numpy as jnp
from jax.experimental import pallas as pl
from jax.experimental.pallas import tpu as pltpu


def _round_up(x, m):
    return (x + m - 1) // m * m


def _qvalue_kernel(x_ref, p_ref, o_ref, *, s, sp, hid_p, act):
    # Static slices of the packed parameter buffer (row offsets are multiples
    # of 8, lane offsets are 0 / multiples of 128 -> no layout shuffles).
    w1 = p_ref[0:s, 0:hid_p]                        # [S, HID_P]
    b1 = p_ref[sp:sp + 1, 0:hid_p]                  # [1, HID_P]
    w2 = p_ref[sp + 8:sp + 8 + hid_p, :]            # [HID_P, LANE]
    b2 = p_ref[sp + 8 + hid_p:sp + 9 + hid_p, :]    # [1, LANE]

    # Cast x to the weight dtype in-kernel (free on the VPU; avoids the extra
    # HBM pass a wrapper-side astype would cost).
    x = x_ref[...].astype(w1.dtype)                 # [TILE_B, S]

    # h = relu(x @ W1 + b1), f32 accumulation on the MXU.
    h = jnp.dot(x, w1, preferred_element_type=jnp.float32)
    h = jnp.maximum(h + b1.astype(jnp.float32), 0.0)

    # q = h @ W2 + b2
    q = jnp.dot(h.astype(w2.dtype), w2, preferred_element_type=jnp.float32)
    q = q + b2.astype(jnp.float32)

    # A-wide store: only the real action columns hit HBM.
    o_ref[...] = q[:, :act].astype(o_ref.dtype)


def pack_params(w1, b1, w2, b2, *, dtype=jnp.bfloat16):
    """Pack W1/b1/W2/b2 into ONE lane-aligned buffer (single param DMA).

    Call once at init / whenever the weights change — NOT per forward call.
    Row layout: [W1 (SP rows) | b1 (8 rows, row 0 valid) |
                 W2 (HID_P rows) | b2 (8 rows, row 0 valid)].
    """
    S, H = w1.shape
    A = w2.shape[1]
    SP = _round_up(S, 8)
    HID_P = _round_up(H, 128)
    LANE = max(HID_P, _round_up(A, 128))
    R = SP + 16 + HID_P
    p = jnp.zeros((R, LANE), dtype)
    p = p.at[:S, :H].set(w1.astype(dtype))
    p = p.at[SP, :H].set(b1.astype(dtype))
    p = p.at[SP + 8:SP + 8 + H, :A].set(w2.astype(dtype))
    p = p.at[SP + 8 + HID_P, :A].set(b2.astype(dtype))
    return p


def _choose_tile_b(B, max_tile):
    if B <= 1024:
        return max(8, _round_up(B, 8))              # single grid step
    # >=2 balanced steps (both v7x TensorCores get work), capped for VMEM.
    return min(max_tile, _round_up((B + 1) // 2, 8))


@functools.partial(jax.jit,
                   static_argnames=("hidden_dim", "action_dim", "max_tile_b"))
def qvalue_net(x, params, *, hidden_dim, action_dim, max_tile_b=2048):
    """x: [B, state_dim]; params: buffer from pack_params().
    Returns q-values [B, action_dim] in x.dtype."""
    B, S = x.shape
    H, A = hidden_dim, action_dim
    SP = _round_up(S, 8)
    HID_P = _round_up(H, 128)
    LANE = max(HID_P, _round_up(A, 128))
    R = SP + 16 + HID_P
    assert params.shape == (R, LANE), (params.shape, (R, LANE))

    TILE_B = _choose_tile_b(B, max_tile_b)
    grid = (pl.cdiv(B, TILE_B),)

    kernel = functools.partial(_qvalue_kernel, s=S, sp=SP, hid_p=HID_P, act=A)

    cost = pl.CostEstimate(
        flops=2 * B * (S * H + H * A),
        transcendentals=0,
        bytes_accessed=(x.size * x.dtype.itemsize
                        + params.size * params.dtype.itemsize
                        + B * A * x.dtype.itemsize),
    )

    return pl.pallas_call(
        kernel,
        out_shape=jax.ShapeDtypeStruct((B, A), x.dtype),
        grid=grid,
        in_specs=[
            pl.BlockSpec((TILE_B, S), lambda i: (i, 0)),   # pipelined x tiles
            pl.BlockSpec((R, LANE), lambda i: (0, 0)),     # weights VMEM-resident
        ],
        out_specs=pl.BlockSpec((TILE_B, A), lambda i: (i, 0)),
        compiler_params=pltpu.CompilerParams(
            dimension_semantics=("parallel",)),            # megacore split on v7x
        cost_estimate=cost,
    )(x, params)


def init_params(key, state_dim, action_dim, hidden_dim_1):
    """Deterministic init mimicking torch.nn.Linear (uniform +/- 1/sqrt(fan_in)).
    Weights stored transposed: [in_dim, out_dim]."""
    k1, k2, k3, k4 = jax.random.split(key, 4)
    bound1 = 1.0 / jnp.sqrt(state_dim)
    bound2 = 1.0 / jnp.sqrt(hidden_dim_1)
    w1 = jax.random.uniform(k1, (state_dim, hidden_dim_1), jnp.float32, -bound1, bound1)
    b1 = jax.random.uniform(k2, (hidden_dim_1,), jnp.float32, -bound1, bound1)
    w2 = jax.random.uniform(k3, (hidden_dim_1, action_dim), jnp.float32, -bound2, bound2)
    b2 = jax.random.uniform(k4, (action_dim,), jnp.float32, -bound2, bound2)
    return w1, b1, w2, b2


if __name__ == "__main__":
    # Shapes consistent with the module: state_dim=16, hidden_dim_1=32,
    # action_dim=4, batch=2.  (hidden_dim_2 is unused by the PyTorch forward.)
    batch, state_dim, action_dim, hidden_dim_1 = 2, 16, 4, 32

    key = jax.random.PRNGKey(0)
    kx, kp = jax.random.split(key)
    x = jax.random.normal(kx, (batch, state_dim), jnp.float32)
    w1, b1, w2, b2 = init_params(kp, state_dim, action_dim, hidden_dim_1)
    ref = jnp.maximum(x @ w1 + b1, 0.0) @ w2 + b2

    # Exact f32 path (matches the PyTorch reference numerics).
    p_f32 = pack_params(w1, b1, w2, b2, dtype=jnp.float32)
    q = qvalue_net(x, p_f32, hidden_dim=hidden_dim_1, action_dim=action_dim)
    q = jax.block_until_ready(q)
    assert q.shape == (batch, action_dim)
    assert jnp.allclose(q, ref, atol=1e-5, rtol=1e-5)

    # Fast path: bf16 weights / activations with f32 accumulation (small drift).
    p_bf16 = pack_params(w1, b1, w2, b2)   # bfloat16 default
    q_bf = jax.block_until_ready(
        qvalue_net(x, p_bf16, hidden_dim=hidden_dim_1, action_dim=action_dim))
    assert q_bf.shape == (batch, action_dim)
    assert jnp.allclose(q_bf, ref, atol=5e-2, rtol=5e-2)

    # Large ragged batch -> 2 balanced grid steps, pipelined x / output tiles.
    big_b = 3000
    xb = jax.random.normal(kx, (big_b, state_dim), jnp.float32)
    refb = jnp.maximum(xb @ w1 + b1, 0.0) @ w2 + b2
    qb = jax.block_until_ready(
        qvalue_net(xb, p_f32, hidden_dim=hidden_dim_1, action_dim=action_dim))
    assert qb.shape == (big_b, action_dim)
    assert jnp.allclose(qb, refb, atol=1e-4, rtol=1e-4)

    print("KERNEL_OK")
</pallas_src>

<mosaic_0001>
module attributes {stable_mosaic.version = 11 : i64} {
  func.func @_qvalue_kernel(%arg0: i32, %arg1: memref<8x16xf32, #tpu.memory_space<vmem>>, %arg2: memref<160x128xf32, #tpu.memory_space<vmem>>, %arg3: memref<8x4xf32, #tpu.memory_space<vmem>>) attributes {dimension_semantics = [#tpu.dimension_semantics<parallel>], iteration_bounds = array<i64: 1>, scalar_prefetch = 0 : i64, scratch_operands = 0 : i64, tpu.core_type = #tpu.core_type<tc>, window_params = [{transform_indices = @transform_0, window_bounds = array<i64: 8, 16>}, {pipeline_mode = #tpu.pipeline_mode<synchronous>, transform_indices = @transform_1, window_bounds = array<i64: 160, 128>}, {transform_indices = @transform_2, window_bounds = array<i64: 8, 4>}]} {
    %c0 = arith.constant 0 : index
    %c0_0 = arith.constant 0 : index
    %0 = vector.load %arg2[%c0, %c0_0] : memref<160x128xf32, #tpu.memory_space<vmem>>, vector<16x128xf32>
    %c16 = arith.constant 16 : index
    %c0_1 = arith.constant 0 : index
    %1 = vector.load %arg2[%c16, %c0_1] : memref<160x128xf32, #tpu.memory_space<vmem>>, vector<1x128xf32>
    %c24 = arith.constant 24 : index
    %c0_2 = arith.constant 0 : index
    %2 = vector.load %arg2[%c24, %c0_2] : memref<160x128xf32, #tpu.memory_space<vmem>>, vector<128x128xf32>
    %c152 = arith.constant 152 : index
    %c0_3 = arith.constant 0 : index
    %3 = vector.load %arg2[%c152, %c0_3] : memref<160x128xf32, #tpu.memory_space<vmem>>, vector<1x128xf32>
    %c0_4 = arith.constant 0 : index
    %c0_5 = arith.constant 0 : index
    %4 = vector.load %arg1[%c0_4, %c0_5] : memref<8x16xf32, #tpu.memory_space<vmem>>, vector<8x16xf32>
    %cst = arith.constant dense<0.000000e+00> : vector<8x128xf32>
    %5 = tpu.matmul %4, %0, %cst {dimension_numbers = #tpu.dot_dimension_numbers<[1], [0], [0], [1], [0, 0, 1, 1], [], []>} : vector<8x16xf32>, vector<16x128xf32>, vector<8x128xf32> -> vector<8x128xf32>
    %6 = vector.broadcast %1 : vector<1x128xf32> to vector<8x128xf32>
    %7 = arith.addf %5, %6 : vector<8x128xf32>
    %cst_6 = arith.constant 0.000000e+00 : f32
    %8 = vector.broadcast %cst_6 : f32 to vector<8x128xf32>
    %9 = arith.maximumf %7, %8 : vector<8x128xf32>
    %cst_7 = arith.constant dense<0.000000e+00> : vector<8x128xf32>
    %10 = tpu.matmul %9, %2, %cst_7 {dimension_numbers = #tpu.dot_dimension_numbers<[1], [0], [0], [1], [0, 0, 1, 1], [], []>} : vector<8x128xf32>, vector<128x128xf32>, vector<8x128xf32> -> vector<8x128xf32>
    %11 = vector.broadcast %3 : vector<1x128xf32> to vector<8x128xf32>
    %12 = arith.addf %10, %11 : vector<8x128xf32>
    %13 = vector.extract_strided_slice %12 {offsets = [0, 0], sizes = [8, 4], strides = [1, 1]} : vector<8x128xf32> to vector<8x4xf32>
    %c0_8 = arith.constant 0 : index
    %c0_9 = arith.constant 0 : index
    %14 = vector.load %arg3[%c0_8, %c0_9] : memref<8x4xf32, #tpu.memory_space<vmem>>, vector<8x4xf32>
    tpu.vector_store %arg3[%c0_8, %c0_9], %13 {strides = array<i32>} : memref<8x4xf32, #tpu.memory_space<vmem>>, vector<8x4xf32>,
    return
  }
  func.func @transform_0(%arg0: i32) -> (i32, i32) {
    %c0_i32 = arith.constant 0 : i32
    %c0_i32_0 = arith.constant 0 : i32
    return %arg0, %c0_i32 : i32, i32
  }
  func.func @transform_1(%arg0: i32) -> (i32, i32) {
    %c0_i32 = arith.constant 0 : i32
    %c0_i32_0 = arith.constant 0 : i32
    %c0_i32_1 = arith.constant 0 : i32
    return %c0_i32, %c0_i32_0 : i32, i32
  }
  func.func @transform_2(%arg0: i32) -> (i32, i32) {
    %c0_i32 = arith.constant 0 : i32
    %c0_i32_0 = arith.constant 0 : i32
    return %arg0, %c0_i32 : i32, i32
  }
}

</mosaic_0001>

<llo_original>
// kernel: qvalue_net.1
$region0: #{qvalue_net.1}
  #allocation0 [shape = 'u32[]', space=smem, size = 0x4, offset = 0x4, fixed_abs, tag = 'smem constant byte address 0x4 - core index']
  #allocation1 [shape = 'u32[72,128]{1,0:T(1,128)}', space=vmem, size = 0x9000, scoped, tag = 'internal scratch']
  %s0 = inlined_call_operand.hbm [shape: f32[2,16], index: 0, kind: input, shape index: {}]
  %s1 = inlined_call_operand.hbm [shape: f32[160,128], index: 1, kind: input, shape index: {}]
  %s2 = inlined_call_operand.hbm [shape: f32[2,4], index: 2, kind: output, shape index: {}]
  %s3 = sld [smem:[#allocation0]]
  $region26: #{qvalue_net.1} parent=0
    _
  %s5 = ssub.s32 1, %s3
  %s6 = scalar_select 0, %s5, %s3
  $region1: #{qvalue_net.1} parent=0
    #allocation2 [shape = 'u8[4096]{0}', space=vmem, size = 0x1000, scoped, tag = 'input window, operand 0, single buffered']
    #allocation3 [shape = 's32[1]{0}', space=sflag, size = 0x4, scoped, tag = 'scoped memory for qvalue_net.1']
    #allocation4 [shape = 's32[1]{0}', space=sflag, size = 0x4, scoped, tag = 'scoped memory for qvalue_net.1']
    #allocation5 [shape = 'u8[81920]{0}', space=vmem, size = 0x14000, scoped, tag = 'input window, operand 1, single buffered']
    #allocation6 [shape = 's32[1]{0}', space=sflag, size = 0x4, scoped, tag = 'scoped memory for qvalue_net.1']
    #allocation7 [shape = 'u8[4096]{0}', space=vmem, size = 0x1000, scoped, tag = 'output window, operand 0, single buffered']
    %7 = vsyncpa [#allocation3], 0
    %8 = vsyncpa [#allocation6], 0
    %9 = vsyncpa [#allocation4], 0
    // Predicated region
    $region2: #{qvalue_net.1} parent=1 // pred_check
      _
    $region3: #{qvalue_net.1} parent=1 // pred_check_branch
      %11 = sbr.rel (0) target = $region5
    $region4: #{qvalue_net.1} parent=1 // pred_region
      %13 = vsyncadd [#allocation3], 96
      %s14 = sshll.u32 %s0, 4
      %s15 = int_to_ptr.hbm [resolvable:$true] %s14
      %s16 = sshll.u32 [#allocation2], 4
      %s17 = int_to_ptr.vmem [resolvable:$true] %s16
      %22 = dma.hbm_to_vmem [thread:$0]  %s15, 32, %s17, [#allocation3], 32, 32, 2
    $region5: #{qvalue_net.1} parent=1 // pred_fallthru
      _
    // Predicated region
    $region6: #{qvalue_net.1} parent=1 // pred_check
      _
    $region7: #{qvalue_net.1} parent=1 // pred_check_branch
      %24 = sbr.rel (0) target = $region9
    $region8: #{qvalue_net.1} parent=1 // pred_region
      %26 = vsyncadd [#allocation6], 0
      %s27 = sshll.u32 %s1, 4
      %s28 = int_to_ptr.hbm [resolvable:$true] %s27
      %s29 = sshll.u32 [#allocation5], 4
      %s30 = int_to_ptr.vmem [resolvable:$true] %s29
      %35 = dma.hbm_to_vmem [thread:$0]  %s28, 2560, %s30, [#allocation6], 128, 128, 8
    $region9: #{qvalue_net.1} parent=1 // pred_fallthru
      _
    // Predicated region
    $region10: #{qvalue_net.1} parent=1 // pred_check
      _
    $region11: #{qvalue_net.1} parent=1 // pred_check_branch
      %37 = sbr.rel (0) target = $region13
    $region12: #{qvalue_net.1} parent=1 // pred_region
      %39 = dma.done [#allocation3], 128
    $region13: #{qvalue_net.1} parent=1 // pred_fallthru
      _
    // Predicated region
    $region14: #{qvalue_net.1} parent=1 // pred_check
      _
    $region15: #{qvalue_net.1} parent=1 // pred_check_branch
      %41 = sbr.rel (0) target = $region17
    $region16: #{qvalue_net.1} parent=1 // pred_region
      %43 = dma.done [#allocation6], 2560
    $region17: #{qvalue_net.1} parent=1 // pred_fallthru
      _
    %v44 = vld [vmem:[#allocation5] sm:$0xff]
    %v45 = vld [vmem:[#allocation5 + $0x8] sm:$0xff]
    %v46 = vld [vmem:[#allocation5 + $0x10] sm:$0x1]
    %v47 = vld [vmem:[#allocation5 + $0x18] sm:$0xff]
    %v48 = vld [vmem:[#allocation5 + $0x20] sm:$0xff]
    %v49 = vld [vmem:[#allocation5 + $0x28] sm:$0xff]
    %v50 = vld [vmem:[#allocation5 + $0x30] sm:$0xff]
    %v51 = vld [vmem:[#allocation5 + $0x38] sm:$0xff]
    %v52 = vld [vmem:[#allocation5 + $0x40] sm:$0xff]
    %v53 = vld [vmem:[#allocation5 + $0x48] sm:$0xff]
    %v54 = vld [vmem:[#allocation5 + $0x50] sm:$0xff]
    %v55 = vld [vmem:[#allocation5 + $0x58] sm:$0xff]
    %v56 = vld [vmem:[#allocation5 + $0x60] sm:$0xff]
    %v57 = vld [vmem:[#allocation5 + $0x68] sm:$0xff]
    %v58 = vld [vmem:[#allocation5 + $0x70] sm:$0xff]
    %v59 = vld [vmem:[#allocation5 + $0x78] sm:$0xff]
    %v60 = vld [vmem:[#allocation5 + $0x80] sm:$0xff]
    %v61 = vld [vmem:[#allocation5 + $0x88] sm:$0xff]
    %v62 = vld [vmem:[#allocation5 + $0x90] sm:$0xff]
    %v63 = vld [vmem:[#allocation5 + $0x98] sm:$0x1]
    %v64 = vld [vmem:[#allocation2] sm:$0xff]
    %v65 = vperm.slane %v46, 0
    %vm66 = vcmask 130048
    %v68 = vsel %vm66, %v64, 0
    %70 = vmatpush.msra.mxu0 0.0
    %71 = vmatpush.msra.mxu0 0.0
    %72 = vmatpush.msra.mxu0 0.0
    %73 = vmatpush.msra.mxu0 0.0
    %74 = vmatpush.msra.mxu0 0.0
    %75 = vmatpush.msra.mxu0 0.0
    %76 = vmatpush.msra.mxu0 0.0
    %77 = vmatpush.msra.mxu0 0.0
    %78 = vmatpush.msra.mxu0 0.0
    %79 = vmatpush.msra.mxu0 0.0
    %80 = vmatpush.msra.mxu0 0.0
    %81 = vmatpush.msra.mxu0 0.0
    %82 = vmatpush.msra.mxu0 0.0
    %83 = vmatpush.msra.mxu0 0.0
    %84 = vmatpush.msra.mxu0 %v45
    %85 = vmatpush.msra.mxu0 %v44
    %86 = vmatmul.f32.gmra.mxu0 %v68
    %v87 = vpop.f32.mrf.mxu0
    %v88 = vadd.f32 %v65, %v87
    %89 = vdwg.mxu0
    %v90 = vmax.f32 %v88, 0.0
    %v91 = vperm.slane %v63, 0
    %92 = vmatpush.msra.mxu0 %v62
    %93 = vmatpush.msra.mxu0 %v61
    %94 = vmatpush.msra.mxu0 %v60
    %95 = vmatpush.msra.mxu0 %v59
    %96 = vmatpush.msra.mxu0 %v58
    %97 = vmatpush.msra.mxu0 %v57
    %98 = vmatpush.msra.mxu0 %v56
    %99 = vmatpush.msra.mxu0 %v55
    %100 = vmatpush.msra.mxu0 %v54
    %101 = vmatpush.msra.mxu0 %v53
    %102 = vmatpush.msra.mxu0 %v52
    %103 = vmatpush.msra.mxu0 %v51
    %104 = vmatpush.msra.mxu0 %v50
    %105 = vmatpush.msra.mxu0 %v49
    %106 = vmatpush.msra.mxu0 %v48
    %107 = vmatpush.msra.mxu0 %v47
    %108 = vmatmul.f32.gmra.mxu0 %v90
    %v109 = vpop.f32.mrf.mxu0
    %v110 = vadd.f32 %v91, %v109
    %111 = vdwg.mxu0
    %vm112 = vcmask 31744
    %113 = vst.msk [vmem:[#allocation7] sm:$0xff] %vm112, %v110
    // Predicated region
    $region18: #{qvalue_net.1} parent=1 // pred_check
      _
    $region19: #{qvalue_net.1} parent=1 // pred_check_branch
      %115 = sbr.rel (0) target = $region21
    $region20: #{qvalue_net.1} parent=1 // pred_region
      %117 = vsyncadd [#allocation4], 96
      %s118 = sshll.u32 [#allocation7], 4
      %s119 = int_to_ptr.vmem [resolvable:$true] %s118
      %s120 = sshll.u32 %s2, 4
      %s121 = int_to_ptr.hbm [resolvable:$true] %s120
      %126 = dma.vmem_to_hbm [thread:$0]  %s119, 32, %s121, [#allocation4], 32, 32, 2
    $region21: #{qvalue_net.1} parent=1 // pred_fallthru
      _
    // Predicated region
    $region22: #{qvalue_net.1} parent=1 // pred_check
      _
    $region23: #{qvalue_net.1} parent=1 // pred_check_branch
      %128 = sbr.rel (0) target = $region25
    $region24: #{qvalue_net.1} parent=1 // pred_region
      %130 = dma.done [#allocation4], 128
    $region25: #{qvalue_net.1} parent=1 // pred_fallthru
      _
    %131 = vsyncpa [#allocation3], 1
    %132 = vsyncpa [#allocation6], 1
    %133 = vsyncpa [#allocation4], 1

</llo_original>
